<compile_context>
chip_gen: v7x
topology: tpu7x:2x2x1
jax: 0.10.0
libtpu: 0.0.40
codegen_flags: <defaults>
</compile_context>

<pallas_src>
import functools

import jax
import jax.numpy as jnp
from jax.experimental import pallas as pl
from jax.experimental.pallas import tpu as pltpu

LANES = 128


def _force_encoder_kernel(x_ref, w1_ref, wt_ref, b_ref, o_ref,
                          s1, s2, s3, *, alpha, t1):
    # ---- layer 1: pre-paired input (t1, 128) @ (128, 128) ----------------
    x = x_ref[0]                                              # (t1, 128)
    h = jnp.dot(x, w1_ref[...], preferred_element_type=jnp.float32)
    h = h + b_ref[0]
    h = jnp.where(h >= 0, h, alpha * h)

    # Store shifted by one row: scratch[r] == h[r - 1], scratch[0] == 0, so
    # for the next layer:
    #   prev[p] = h[2p-1] = scratch[2p]      (stride-2 load, start 0)
    #   cur [p] = h[2p]   = scratch[2p+1]    (stride-2 load, start 1)
    s1[pl.ds(0, 1), :] = jnp.zeros((1, LANES), jnp.float32)
    s1[pl.ds(1, t1), :] = h

    # ---- layers 2..4 (two tap-matmuls each, accumulated in f32) ----------
    scratches = (s1, s2, s3)
    t = t1
    for l in range(3):
        scr = scratches[l]
        half = t // 2
        prev = scr[pl.ds(0, half, 2), :]                      # h_prev[2p-1]
        cur = scr[pl.ds(1, half, 2), :]                       # h_prev[2p]
        y = (jnp.dot(prev, wt_ref[l, 0, :, :],
                     preferred_element_type=jnp.float32)
             + jnp.dot(cur, wt_ref[l, 1, :, :],
                       preferred_element_type=jnp.float32))
        y = y + b_ref[l + 1]
        y = jnp.where(y >= 0, y, alpha * y)
        if l < 2:
            nxt = scratches[l + 1]
            nxt[pl.ds(0, 1), :] = jnp.zeros((1, LANES), jnp.float32)
            nxt[pl.ds(1, half), :] = y
        else:
            o_ref[0] = y.astype(o_ref.dtype)                  # lane-dense store
        t = half


def force_encoder_forward(x, params, z_dim, alpha=0.1):
    """ForceEncoder.forward: 4 x (CausalConv1d k=2 s=2 -> LeakyReLU), split.

    x:      (N, force_dim, T)  (PyTorch NCL layout)
    params: list of 4 (w, b) with w: (C_out, C_in, 2), b: (C_out,)
    returns (h[:, :z_dim, :], h[:, z_dim:, :]) with h: (N, 2*z_dim, T // 16)
    """
    N, c_in, T = x.shape
    assert T % 16 == 0, "T must be divisible by 16 (4 stride-2 layers)"
    assert 2 * c_in <= LANES and 2 * z_dim <= LANES
    t1 = T // 2
    t_out = T // 16

    # ---- layer-1 causal pairing (done once, on the small raw input) ------
    # out[p] = w[:,:,0] @ x[2p-1] + w[:,:,1] @ x[2p] + b   with x[-1] == 0
    x_nlc = jnp.transpose(x, (0, 2, 1)).astype(jnp.float32)   # (N, T, C_in)
    x_shift = jnp.pad(x_nlc, ((0, 0), (1, 0), (0, 0)))[:, :T, :]
    x_pair = x_shift.reshape(N, t1, 2 * c_in)
    x_pair = jnp.pad(x_pair, ((0, 0), (0, 0), (0, LANES - 2 * c_in)))

    # ---- zero-pad weights / biases to 128 lanes ---------------------------
    (w1, b1) = params[0]
    c1 = w1.shape[0]
    w1_slab = jnp.zeros((LANES, LANES), jnp.float32)
    w1_slab = w1_slab.at[0:c_in, 0:c1].set(w1[:, :, 0].T)
    w1_slab = w1_slab.at[c_in:2 * c_in, 0:c1].set(w1[:, :, 1].T)

    wt = jnp.zeros((3, 2, LANES, LANES), jnp.float32)
    bs = jnp.zeros((4, 1, LANES), jnp.float32)
    bs = bs.at[0, 0, 0:c1].set(b1)
    c_prev = c1
    for l, (w, b) in enumerate(params[1:]):
        c_out = w.shape[0]
        assert c_prev <= LANES and c_out <= LANES
        wt = wt.at[l, 0, 0:c_prev, 0:c_out].set(w[:, :, 0].T)
        wt = wt.at[l, 1, 0:c_prev, 0:c_out].set(w[:, :, 1].T)
        bs = bs.at[l + 1, 0, 0:c_out].set(b)
        c_prev = c_out

    flops = 2 * N * LANES * LANES * (t1 + 2 * (t1 // 2)
                                     + 2 * (t1 // 4) + 2 * (t1 // 8))
    bytes_accessed = 4 * (x_pair.size + w1_slab.size + wt.size + bs.size
                          + N * t_out * LANES)

    out = pl.pallas_call(
        functools.partial(_force_encoder_kernel, alpha=alpha, t1=t1),
        out_shape=jax.ShapeDtypeStruct((N, t_out, LANES), jnp.float32),
        grid=(N,),
        in_specs=[
            pl.BlockSpec((1, t1, LANES), lambda n: (n, 0, 0)),
            pl.BlockSpec((LANES, LANES), lambda n: (0, 0)),          # resident
            pl.BlockSpec((3, 2, LANES, LANES), lambda n: (0, 0, 0, 0)),
            pl.BlockSpec((4, 1, LANES), lambda n: (0, 0, 0)),
        ],
        out_specs=pl.BlockSpec((1, t_out, LANES), lambda n: (n, 0, 0)),
        scratch_shapes=[
            pltpu.VMEM((t1 + 8, LANES), jnp.float32),
            pltpu.VMEM((t1 // 2 + 8, LANES), jnp.float32),
            pltpu.VMEM((t1 // 4 + 8, LANES), jnp.float32),
        ],
        compiler_params=pltpu.CompilerParams(
            dimension_semantics=("parallel",)),
        cost_estimate=pl.CostEstimate(
            flops=flops, transcendentals=0, bytes_accessed=bytes_accessed),
    )(x_pair, w1_slab, wt, bs)

    y = out[:, :, :2 * z_dim]                  # drop lane padding
    y = jnp.transpose(y, (0, 2, 1))            # NLC -> NCL (tiny tensor)
    # torch.split(h, z_dim, dim=1) with 2*z_dim channels -> two halves
    return y[:, :z_dim, :], y[:, z_dim:, :]
    # TODO(synk): for very long sequences (T >~ 32k) add a second grid axis
    # tiling time with a 15-step causal halo to bound per-step VMEM.


def init_params(key, force_dim, z_dim):
    """Deterministic synthetic parameters matching the PyTorch layer shapes."""
    channels = [force_dim, 32, 64, 128, 2 * z_dim]
    params = []
    for i in range(4):
        c_in, c_out = channels[i], channels[i + 1]
        key, kw, kb = jax.random.split(key, 3)
        bound = 1.0 / jnp.sqrt(c_in * 2.0)  # kernel_size = 2
        w = jax.random.uniform(kw, (c_out, c_in, 2), jnp.float32, -bound, bound)
        b = jax.random.uniform(kb, (c_out,), jnp.float32, -bound, bound)
        params.append((w, b))
    return params


def _ref_forward(x, params, z_dim, alpha=0.1):
    """Pure-JAX reference replicating PyTorch CausalConv1d + LeakyReLU."""
    h = x
    for (w, b) in params:
        y = jax.lax.conv_general_dilated(
            h, w, window_strides=(2,), padding=[(1, 1)],
            dimension_numbers=("NCH", "OIH", "NCH"))
        y = y + b[None, :, None]
        y = y[:, :, :-1]  # drop the trailing (acausal) step
        h = jnp.where(y >= 0, y, alpha * y)
    return h[:, :z_dim, :], h[:, z_dim:, :]


if __name__ == "__main__":
    N, force_dim, T, z_dim = 2, 6, 32, 8
    key = jax.random.PRNGKey(0)
    kx, kp = jax.random.split(key)
    x = jax.random.normal(kx, (N, force_dim, T), jnp.float32)
    params = init_params(kp, force_dim, z_dim)

    out0, out1 = force_encoder_forward(x, params, z_dim)
    out0, out1 = jax.block_until_ready((out0, out1))

    ref0, ref1 = _ref_forward(x, params, z_dim)
    assert out0.shape == (N, z_dim, T // 16)
    assert out1.shape == (N, z_dim, T // 16)
    assert jnp.allclose(out0, ref0, atol=1e-5, rtol=1e-5)
    assert jnp.allclose(out1, ref1, atol=1e-5, rtol=1e-5)
    print("KERNEL_OK")
</pallas_src>

<mosaic_0001>
module attributes {stable_mosaic.version = 11 : i64} {
  func.func @_force_encoder_kernel(%arg0: i32, %arg1: memref<1x16x128xf32, #tpu.memory_space<vmem>>, %arg2: memref<128x128xf32, #tpu.memory_space<vmem>>, %arg3: memref<3x2x128x128xf32, #tpu.memory_space<vmem>>, %arg4: memref<4x1x128xf32, #tpu.memory_space<vmem>>, %arg5: memref<1x2x128xf32, #tpu.memory_space<vmem>>, %arg6: memref<24x128xf32, #tpu.memory_space<vmem>>, %arg7: memref<16x128xf32, #tpu.memory_space<vmem>>, %arg8: memref<12x128xf32, #tpu.memory_space<vmem>>) attributes {dimension_semantics = [#tpu.dimension_semantics<parallel>], iteration_bounds = array<i64: 2>, scalar_prefetch = 0 : i64, scratch_operands = 3 : i64, tpu.core_type = #tpu.core_type<tc>, window_params = [{transform_indices = @transform_0, window_bounds = array<i64: 1, 16, 128>}, {pipeline_mode = #tpu.pipeline_mode<synchronous>, transform_indices = @transform_1, window_bounds = array<i64: 128, 128>}, {pipeline_mode = #tpu.pipeline_mode<synchronous>, transform_indices = @transform_2, window_bounds = array<i64: 3, 2, 128, 128>}, {pipeline_mode = #tpu.pipeline_mode<synchronous>, transform_indices = @transform_3, window_bounds = array<i64: 4, 1, 128>}, {transform_indices = @transform_4, window_bounds = array<i64: 1, 2, 128>}]} {
    %c0 = arith.constant 0 : index
    %c0_0 = arith.constant 0 : index
    %c0_1 = arith.constant 0 : index
    %0 = vector.load %arg1[%c0, %c0_0, %c0_1] : memref<1x16x128xf32, #tpu.memory_space<vmem>>, vector<1x16x128xf32>
    %1 = vector.shape_cast %0 : vector<1x16x128xf32> to vector<16x128xf32>
    %c0_2 = arith.constant 0 : index
    %c0_3 = arith.constant 0 : index
    %2 = vector.load %arg2[%c0_2, %c0_3] : memref<128x128xf32, #tpu.memory_space<vmem>>, vector<128x128xf32>
    %cst = arith.constant dense<0.000000e+00> : vector<16x128xf32>
    %3 = tpu.matmul %1, %2, %cst {dimension_numbers = #tpu.dot_dimension_numbers<[1], [0], [0], [1], [0, 0, 1, 1], [], []>} : vector<16x128xf32>, vector<128x128xf32>, vector<16x128xf32> -> vector<16x128xf32>
    %c0_4 = arith.constant 0 : index
    %c0_5 = arith.constant 0 : index
    %c0_6 = arith.constant 0 : index
    %4 = vector.load %arg4[%c0_4, %c0_5, %c0_6] : memref<4x1x128xf32, #tpu.memory_space<vmem>>, vector<1x1x128xf32>
    %5 = vector.shape_cast %4 : vector<1x1x128xf32> to vector<1x128xf32>
    %6 = vector.broadcast %5 : vector<1x128xf32> to vector<16x128xf32>
    %7 = arith.addf %3, %6 : vector<16x128xf32>
    %cst_7 = arith.constant 0.000000e+00 : f32
    %8 = vector.broadcast %cst_7 : f32 to vector<16x128xf32>
    %9 = arith.cmpf oge, %7, %8 : vector<16x128xf32>
    %cst_8 = arith.constant 1.000000e-01 : f32
    %10 = vector.broadcast %cst_8 : f32 to vector<16x128xf32>
    %11 = arith.mulf %10, %7 : vector<16x128xf32>
    %12 = arith.select %9, %7, %11 : vector<16x128xi1>, vector<16x128xf32>
    %cst_9 = arith.constant 0.000000e+00 : f32
    %13 = vector.broadcast %cst_9 : f32 to vector<1x128xf32>
    %c0_10 = arith.constant 0 : index
    %c0_11 = arith.constant 0 : index
    %14 = vector.load %arg6[%c0_10, %c0_11] : memref<24x128xf32, #tpu.memory_space<vmem>>, vector<1x128xf32>
    tpu.vector_store %arg6[%c0_10, %c0_11], %13 {strides = array<i32>} : memref<24x128xf32, #tpu.memory_space<vmem>>, vector<1x128xf32>,
    %c1 = arith.constant 1 : index
    %c0_12 = arith.constant 0 : index
    %15 = vector.load %arg6[%c1, %c0_12] : memref<24x128xf32, #tpu.memory_space<vmem>>, vector<16x128xf32>
    tpu.vector_store %arg6[%c1, %c0_12], %12 {strides = array<i32>} : memref<24x128xf32, #tpu.memory_space<vmem>>, vector<16x128xf32>,
    %c0_13 = arith.constant 0 : index
    %c0_14 = arith.constant 0 : index
    %16 = tpu.strided_load %arg6[%c0_13, %c0_14] {strides = array<i32: 2, 1>} : memref<24x128xf32, #tpu.memory_space<vmem>>, vector<8x128xf32>
    %c1_15 = arith.constant 1 : index
    %c0_16 = arith.constant 0 : index
    %17 = tpu.strided_load %arg6[%c1_15, %c0_16] {strides = array<i32: 2, 1>} : memref<24x128xf32, #tpu.memory_space<vmem>>, vector<8x128xf32>
    %c0_17 = arith.constant 0 : index
    %c0_18 = arith.constant 0 : index
    %c0_19 = arith.constant 0 : index
    %c0_20 = arith.constant 0 : index
    %18 = vector.load %arg3[%c0_17, %c0_18, %c0_19, %c0_20] : memref<3x2x128x128xf32, #tpu.memory_space<vmem>>, vector<1x1x128x128xf32>
    %19 = vector.shape_cast %18 : vector<1x1x128x128xf32> to vector<128x128xf32>
    %cst_21 = arith.constant dense<0.000000e+00> : vector<8x128xf32>
    %20 = tpu.matmul %16, %19, %cst_21 {dimension_numbers = #tpu.dot_dimension_numbers<[1], [0], [0], [1], [0, 0, 1, 1], [], []>} : vector<8x128xf32>, vector<128x128xf32>, vector<8x128xf32> -> vector<8x128xf32>
    %c0_22 = arith.constant 0 : index
    %c1_23 = arith.constant 1 : index
    %c0_24 = arith.constant 0 : index
    %c0_25 = arith.constant 0 : index
    %21 = vector.load %arg3[%c0_22, %c1_23, %c0_24, %c0_25] : memref<3x2x128x128xf32, #tpu.memory_space<vmem>>, vector<1x1x128x128xf32>
    %22 = vector.shape_cast %21 : vector<1x1x128x128xf32> to vector<128x128xf32>
    %cst_26 = arith.constant dense<0.000000e+00> : vector<8x128xf32>
    %23 = tpu.matmul %17, %22, %cst_26 {dimension_numbers = #tpu.dot_dimension_numbers<[1], [0], [0], [1], [0, 0, 1, 1], [], []>} : vector<8x128xf32>, vector<128x128xf32>, vector<8x128xf32> -> vector<8x128xf32>
    %24 = arith.addf %20, %23 : vector<8x128xf32>
    %c1_27 = arith.constant 1 : index
    %c0_28 = arith.constant 0 : index
    %c0_29 = arith.constant 0 : index
    %25 = vector.load %arg4[%c1_27, %c0_28, %c0_29] : memref<4x1x128xf32, #tpu.memory_space<vmem>>, vector<1x1x128xf32>
    %26 = vector.shape_cast %25 : vector<1x1x128xf32> to vector<1x128xf32>
    %27 = vector.broadcast %26 : vector<1x128xf32> to vector<8x128xf32>
    %28 = arith.addf %24, %27 : vector<8x128xf32>
    %cst_30 = arith.constant 0.000000e+00 : f32
    %29 = vector.broadcast %cst_30 : f32 to vector<8x128xf32>
    %30 = arith.cmpf oge, %28, %29 : vector<8x128xf32>
    %cst_31 = arith.constant 1.000000e-01 : f32
    %31 = vector.broadcast %cst_31 : f32 to vector<8x128xf32>
    %32 = arith.mulf %31, %28 : vector<8x128xf32>
    %33 = arith.select %30, %28, %32 : vector<8x128xi1>, vector<8x128xf32>
    %cst_32 = arith.constant 0.000000e+00 : f32
    %34 = vector.broadcast %cst_32 : f32 to vector<1x128xf32>
    %c0_33 = arith.constant 0 : index
    %c0_34 = arith.constant 0 : index
    %35 = vector.load %arg7[%c0_33, %c0_34] : memref<16x128xf32, #tpu.memory_space<vmem>>, vector<1x128xf32>
    tpu.vector_store %arg7[%c0_33, %c0_34], %34 {strides = array<i32>} : memref<16x128xf32, #tpu.memory_space<vmem>>, vector<1x128xf32>,
    %c1_35 = arith.constant 1 : index
    %c0_36 = arith.constant 0 : index
    %36 = vector.load %arg7[%c1_35, %c0_36] : memref<16x128xf32, #tpu.memory_space<vmem>>, vector<8x128xf32>
    tpu.vector_store %arg7[%c1_35, %c0_36], %33 {strides = array<i32>} : memref<16x128xf32, #tpu.memory_space<vmem>>, vector<8x128xf32>,
    %c0_37 = arith.constant 0 : index
    %c0_38 = arith.constant 0 : index
    %37 = tpu.strided_load %arg7[%c0_37, %c0_38] {strides = array<i32: 2, 1>} : memref<16x128xf32, #tpu.memory_space<vmem>>, vector<4x128xf32>
    %c1_39 = arith.constant 1 : index
    %c0_40 = arith.constant 0 : index
    %38 = tpu.strided_load %arg7[%c1_39, %c0_40] {strides = array<i32: 2, 1>} : memref<16x128xf32, #tpu.memory_space<vmem>>, vector<4x128xf32>
    %c1_41 = arith.constant 1 : index
    %c0_42 = arith.constant 0 : index
    %c0_43 = arith.constant 0 : index
    %c0_44 = arith.constant 0 : index
    %39 = vector.load %arg3[%c1_41, %c0_42, %c0_43, %c0_44] : memref<3x2x128x128xf32, #tpu.memory_space<vmem>>, vector<1x1x128x128xf32>
    %40 = vector.shape_cast %39 : vector<1x1x128x128xf32> to vector<128x128xf32>
    %cst_45 = arith.constant dense<0.000000e+00> : vector<4x128xf32>
    %41 = tpu.matmul %37, %40, %cst_45 {dimension_numbers = #tpu.dot_dimension_numbers<[1], [0], [0], [1], [0, 0, 1, 1], [], []>} : vector<4x128xf32>, vector<128x128xf32>, vector<4x128xf32> -> vector<4x128xf32>
    %c1_46 = arith.constant 1 : index
    %c1_47 = arith.constant 1 : index
    %c0_48 = arith.constant 0 : index
    %c0_49 = arith.constant 0 : index
    %42 = vector.load %arg3[%c1_46, %c1_47, %c0_48, %c0_49] : memref<3x2x128x128xf32, #tpu.memory_space<vmem>>, vector<1x1x128x128xf32>
    %43 = vector.shape_cast %42 : vector<1x1x128x128xf32> to vector<128x128xf32>
    %cst_50 = arith.constant dense<0.000000e+00> : vector<4x128xf32>
    %44 = tpu.matmul %38, %43, %cst_50 {dimension_numbers = #tpu.dot_dimension_numbers<[1], [0], [0], [1], [0, 0, 1, 1], [], []>} : vector<4x128xf32>, vector<128x128xf32>, vector<4x128xf32> -> vector<4x128xf32>
    %45 = arith.addf %41, %44 : vector<4x128xf32>
    %c2 = arith.constant 2 : index
    %c0_51 = arith.constant 0 : index
    %c0_52 = arith.constant 0 : index
    %46 = vector.load %arg4[%c2, %c0_51, %c0_52] : memref<4x1x128xf32, #tpu.memory_space<vmem>>, vector<1x1x128xf32>
    %47 = vector.shape_cast %46 : vector<1x1x128xf32> to vector<1x128xf32>
    %48 = vector.broadcast %47 : vector<1x128xf32> to vector<4x128xf32>
    %49 = arith.addf %45, %48 : vector<4x128xf32>
    %cst_53 = arith.constant 0.000000e+00 : f32
    %50 = vector.broadcast %cst_53 : f32 to vector<4x128xf32>
    %51 = arith.cmpf oge, %49, %50 : vector<4x128xf32>
    %cst_54 = arith.constant 1.000000e-01 : f32
    %52 = vector.broadcast %cst_54 : f32 to vector<4x128xf32>
    %53 = arith.mulf %52, %49 : vector<4x128xf32>
    %54 = arith.select %51, %49, %53 : vector<4x128xi1>, vector<4x128xf32>
    %cst_55 = arith.constant 0.000000e+00 : f32
    %55 = vector.broadcast %cst_55 : f32 to vector<1x128xf32>
    %c0_56 = arith.constant 0 : index
    %c0_57 = arith.constant 0 : index
    %56 = vector.load %arg8[%c0_56, %c0_57] : memref<12x128xf32, #tpu.memory_space<vmem>>, vector<1x128xf32>
    tpu.vector_store %arg8[%c0_56, %c0_57], %55 {strides = array<i32>} : memref<12x128xf32, #tpu.memory_space<vmem>>, vector<1x128xf32>,
    %c1_58 = arith.constant 1 : index
    %c0_59 = arith.constant 0 : index
    %57 = vector.load %arg8[%c1_58, %c0_59] : memref<12x128xf32, #tpu.memory_space<vmem>>, vector<4x128xf32>
    tpu.vector_store %arg8[%c1_58, %c0_59], %54 {strides = array<i32>} : memref<12x128xf32, #tpu.memory_space<vmem>>, vector<4x128xf32>,
    %c0_60 = arith.constant 0 : index
    %c0_61 = arith.constant 0 : index
    %58 = tpu.strided_load %arg8[%c0_60, %c0_61] {strides = array<i32: 2, 1>} : memref<12x128xf32, #tpu.memory_space<vmem>>, vector<2x128xf32>
    %c1_62 = arith.constant 1 : index
    %c0_63 = arith.constant 0 : index
    %59 = tpu.strided_load %arg8[%c1_62, %c0_63] {strides = array<i32: 2, 1>} : memref<12x128xf32, #tpu.memory_space<vmem>>, vector<2x128xf32>
    %c2_64 = arith.constant 2 : index
    %c0_65 = arith.constant 0 : index
    %c0_66 = arith.constant 0 : index
    %c0_67 = arith.constant 0 : index
    %60 = vector.load %arg3[%c2_64, %c0_65, %c0_66, %c0_67] : memref<3x2x128x128xf32, #tpu.memory_space<vmem>>, vector<1x1x128x128xf32>
    %61 = vector.shape_cast %60 : vector<1x1x128x128xf32> to vector<128x128xf32>
    %cst_68 = arith.constant dense<0.000000e+00> : vector<2x128xf32>
    %62 = tpu.matmul %58, %61, %cst_68 {dimension_numbers = #tpu.dot_dimension_numbers<[1], [0], [0], [1], [0, 0, 1, 1], [], []>} : vector<2x128xf32>, vector<128x128xf32>, vector<2x128xf32> -> vector<2x128xf32>
    %c2_69 = arith.constant 2 : index
    %c1_70 = arith.constant 1 : index
    %c0_71 = arith.constant 0 : index
    %c0_72 = arith.constant 0 : index
    %63 = vector.load %arg3[%c2_69, %c1_70, %c0_71, %c0_72] : memref<3x2x128x128xf32, #tpu.memory_space<vmem>>, vector<1x1x128x128xf32>
    %64 = vector.shape_cast %63 : vector<1x1x128x128xf32> to vector<128x128xf32>
    %cst_73 = arith.constant dense<0.000000e+00> : vector<2x128xf32>
    %65 = tpu.matmul %59, %64, %cst_73 {dimension_numbers = #tpu.dot_dimension_numbers<[1], [0], [0], [1], [0, 0, 1, 1], [], []>} : vector<2x128xf32>, vector<128x128xf32>, vector<2x128xf32> -> vector<2x128xf32>
    %66 = arith.addf %62, %65 : vector<2x128xf32>
    %c3 = arith.constant 3 : index
    %c0_74 = arith.constant 0 : index
    %c0_75 = arith.constant 0 : index
    %67 = vector.load %arg4[%c3, %c0_74, %c0_75] : memref<4x1x128xf32, #tpu.memory_space<vmem>>, vector<1x1x128xf32>
    %68 = vector.shape_cast %67 : vector<1x1x128xf32> to vector<1x128xf32>
    %69 = vector.broadcast %68 : vector<1x128xf32> to vector<2x128xf32>
    %70 = arith.addf %66, %69 : vector<2x128xf32>
    %cst_76 = arith.constant 0.000000e+00 : f32
    %71 = vector.broadcast %cst_76 : f32 to vector<2x128xf32>
    %72 = arith.cmpf oge, %70, %71 : vector<2x128xf32>
    %cst_77 = arith.constant 1.000000e-01 : f32
    %73 = vector.broadcast %cst_77 : f32 to vector<2x128xf32>
    %74 = arith.mulf %73, %70 : vector<2x128xf32>
    %75 = arith.select %72, %70, %74 : vector<2x128xi1>, vector<2x128xf32>
    %c0_78 = arith.constant 0 : index
    %c0_79 = arith.constant 0 : index
    %c0_80 = arith.constant 0 : index
    %76 = vector.load %arg5[%c0_78, %c0_79, %c0_80] : memref<1x2x128xf32, #tpu.memory_space<vmem>>, vector<1x2x128xf32>
    %77 = vector.shape_cast %76 : vector<1x2x128xf32> to vector<2x128xf32>
    %78 = vector.shape_cast %75 : vector<2x128xf32> to vector<1x2x128xf32>
    tpu.vector_store %arg5[%c0_78, %c0_79, %c0_80], %78 {strides = array<i32>} : memref<1x2x128xf32, #tpu.memory_space<vmem>>, vector<1x2x128xf32>,
    return
  }
  func.func @transform_0(%arg0: i32) -> (i32, i32, i32) {
    %c0_i32 = arith.constant 0 : i32
    %c0_i32_0 = arith.constant 0 : i32
    %c0_i32_1 = arith.constant 0 : i32
    return %arg0, %c0_i32, %c0_i32_0 : i32, i32, i32
  }
  func.func @transform_1(%arg0: i32) -> (i32, i32) {
    %c0_i32 = arith.constant 0 : i32
    %c0_i32_0 = arith.constant 0 : i32
    %c0_i32_1 = arith.constant 0 : i32
    return %c0_i32, %c0_i32_0 : i32, i32
  }
  func.func @transform_2(%arg0: i32) -> (i32, i32, i32, i32) {
    %c0_i32 = arith.constant 0 : i32
    %c0_i32_0 = arith.constant 0 : i32
    %c0_i32_1 = arith.constant 0 : i32
    %c0_i32_2 = arith.constant 0 : i32
    %c0_i32_3 = arith.constant 0 : i32
    return %c0_i32, %c0_i32_0, %c0_i32_1, %c0_i32_2 : i32, i32, i32, i32
  }
  func.func @transform_3(%arg0: i32) -> (i32, i32, i32) {
    %c0_i32 = arith.constant 0 : i32
    %c0_i32_0 = arith.constant 0 : i32
    %c0_i32_1 = arith.constant 0 : i32
    %c0_i32_2 = arith.constant 0 : i32
    return %c0_i32, %c0_i32_0, %c0_i32_1 : i32, i32, i32
  }
  func.func @transform_4(%arg0: i32) -> (i32, i32, i32) {
    %c0_i32 = arith.constant 0 : i32
    %c0_i32_0 = arith.constant 0 : i32
    %c0_i32_1 = arith.constant 0 : i32
    return %arg0, %c0_i32, %c0_i32_0 : i32, i32, i32
  }
}

</mosaic_0001>

<llo_original>
// kernel: tpu_custom_call.1
$region0: #{tpu_custom_call.1}
  #allocation0 [shape = 'u32[]', space=smem, size = 0x4, offset = 0x4, fixed_abs, tag = 'smem constant byte address 0x4 - core index']
  #allocation1 [shape = 'u32[144,128]{1,0:T(1,128)}', space=vmem, size = 0x12000, scoped, tag = 'internal scratch']
  #allocation2 [shape = 'f32[24,128]{1,0:T(8,128)}', space=vmem, size = 0x3000, scoped, tag = 'scratch operand']
  #allocation3 [shape = 'f32[16,128]{1,0:T(8,128)}', space=vmem, size = 0x2000, scoped, tag = 'scratch operand']
  #allocation4 [shape = 'f32[12,128]{1,0:T(8,128)}', space=vmem, size = 0x2000, scoped, tag = 'scratch operand']
  %s0 = inlined_call_operand.hbm [shape: f32[2,16,128], index: 0, kind: input, shape index: {}]
  %s1 = inlined_call_operand.hbm [shape: f32[128,128], index: 1, kind: input, shape index: {}]
  %s2 = inlined_call_operand.hbm [shape: f32[3,2,128,128], index: 2, kind: input, shape index: {}]
  %s3 = inlined_call_operand.vmem [shape: f32[4,1,128], index: 3, kind: input, shape index: {}]
  %s4 = inlined_call_operand.hbm [shape: f32[2,2,128], index: 4, kind: output, shape index: {}]
  %s5 = sld [smem:[#allocation0]]
  $region61: #{tpu_custom_call.1} parent=0
    _
  %s7 = ssub.s32 1, %s5
  %s8 = scalar_select 0, %s7, %s5
  $region1: #{tpu_custom_call.1} parent=0
    #allocation5 [shape = 'u8[16384]{0}', space=vmem, size = 0x4000, scoped, tag = 'input window, operand 0']
    #allocation6 [shape = 's32[2]{0}', space=sflag, size = 0x8, scoped, tag = 'scoped memory for tpu_custom_call.1']
    #allocation7 [shape = 's32[2]{0}', space=sflag, size = 0x8, scoped, tag = 'scoped memory for tpu_custom_call.1']
    #allocation8 [shape = 'u8[65536]{0}', space=vmem, size = 0x10000, scoped, tag = 'input window, operand 1, single buffered']
    #allocation9 [shape = 's32[1]{0}', space=sflag, size = 0x4, scoped, tag = 'scoped memory for tpu_custom_call.1']
    #allocation10 [shape = 'u8[393216]{0}', space=vmem, size = 0x60000, scoped, tag = 'input window, operand 2, single buffered']
    #allocation11 [shape = 'u8[2048]{0}', space=vmem, size = 0x800, scoped, tag = 'output window, operand 0']
    %9 = vsyncpa [#allocation6], 0
    %s10 = scalar_lea.sflag [#allocation6], 1
    %11 = vsyncpa %s10, 0
    %12 = vsyncpa [#allocation9], 0
    %13 = vsyncpa [#allocation7], 0
    %s14 = scalar_lea.sflag [#allocation7], 1
    %15 = vsyncpa %s14, 0
    loop: start=0, step=1, limit=4
    $region2: #{tpu_custom_call.1} parent=1 // loop_pre_header
      _
    $region3: #{tpu_custom_call.1} parent=1 // loop_header
      %s17 = sphi 0, %s21
      %p18 = scmp.ge.s32.totalorder %s17, 4
      %s27 = sphi 0, %s29
      %s30 = sphi 0, %s27
      %s31 = sphi 0, %s30
      %s47 = sphi 0, %s31
      %s51 = sphi 0, %s51
      %s53 = sphi 0, %s51
      %s54 = sphi 0, %s53
      %s68 = sphi 0, %s54
      %s72 = sphi 0, %s72
      %s74 = sphi 0, %s72
      %s75 = sphi 0, %s74
      %s89 = sphi 0, %s75
      %s93 = sphi 0, %s93
      %s95 = sphi 0, %s93
      %s96 = sphi 0, %s95
      %s110 = sphi 0, %s96
      %s116 = sphi 0, %s118
      %s119 = sphi 0, %s116
      %s120 = sphi 0, %s119
      %s136 = sphi 0, %s120
    $region4: #{tpu_custom_call.1} parent=1 // loop_header_branch
      %20 = sbr.rel (%p18) target = $region8
    $region5: #{tpu_custom_call.1} parent=1 // loop_body
      %s22 = ssub.s32 %s17, 1
      %s23 = ssub.s32 %s17, 2
      %s24 = sadd.s32 %s17, 1
      %s25 = ssub.s32 %s17, %s24
      %p26 = scmp.eq.s32.totalorder %s25, 0
      %s28 = sadd.s32 %s27, 1
      %s29 = scalar_select %p26, %s27, %s28
      %p32 = pneg %p26
      %p33 = scmp.eq.s32.totalorder %s17, 1
      %p34 = por %p32, %p33
      %p35 = scmp.ne.s32.totalorder %s27, %s30
      %p36 = scmp.eq.s32.totalorder %s17, 0
      %p37 = por %p35, %p36
      %p38 = scmp.ne.s32.totalorder %s27, %s30
      %p39 = scmp.eq.s32.totalorder %s22, 1
      %p40 = por %p38, %p39
      %p41 = scmp.ne.s32.totalorder %s30, %s31
      %p42 = scmp.eq.s32.totalorder %s22, 0
      %p43 = por %p41, %p42
      %p44 = scmp.ne.s32.totalorder %s30, %s31
      %p45 = scmp.eq.s32.totalorder %s23, 1
      %p46 = por %p44, %p45
      %p48 = scmp.ne.s32.totalorder %s31, %s47
      %p49 = scmp.eq.s32.totalorder %s23, 0
      %p50 = por %p48, %p49
      %s52 = sadd.s32 %s51, 1
      %p55 = scmp.eq.s32.totalorder %s17, 1
      %p56 = scmp.ne.s32.totalorder %s51, %s53
      %p57 = scmp.eq.s32.totalorder %s17, 0
      %p58 = por %p56, %p57
      %p59 = scmp.ne.s32.totalorder %s51, %s53
      %p60 = scmp.eq.s32.totalorder %s22, 1
      %p61 = por %p59, %p60
      %p62 = scmp.ne.s32.totalorder %s53, %s54
      %p63 = scmp.eq.s32.totalorder %s22, 0
      %p64 = por %p62, %p63
      %p65 = scmp.ne.s32.totalorder %s53, %s54
      %p66 = scmp.eq.s32.totalorder %s23, 1
      %p67 = por %p65, %p66
      %p69 = scmp.ne.s32.totalorder %s54, %s68
      %p70 = scmp.eq.s32.totalorder %s23, 0
      %p71 = por %p69, %p70
      %s73 = sadd.s32 %s72, 1
      %p76 = scmp.eq.s32.totalorder %s17, 1
      %p77 = scmp.ne.s32.totalorder %s72, %s74
      %p78 = scmp.eq.s32.totalorder %s17, 0
      %p79 = por %p77, %p78
      %p80 = scmp.ne.s32.totalorder %s72, %s74
      %p81 = scmp.eq.s32.totalorder %s22, 1
      %p82 = por %p80, %p81
      %p83 = scmp.ne.s32.totalorder %s74, %s75
      %p84 = scmp.eq.s32.totalorder %s22, 0
      %p85 = por %p83, %p84
      %p86 = scmp.ne.s32.totalorder %s74, %s75
      %p87 = scmp.eq.s32.totalorder %s23, 1
      %p88 = por %p86, %p87
      %p90 = scmp.ne.s32.totalorder %s75, %s89
      %p91 = scmp.eq.s32.totalorder %s23, 0
      %p92 = por %p90, %p91
      %s94 = sadd.s32 %s93, 1
      %p97 = scmp.eq.s32.totalorder %s17, 1
      %p98 = scmp.ne.s32.totalorder %s93, %s95
      %p99 = scmp.eq.s32.totalorder %s17, 0
      %p100 = por %p98, %p99
      %p101 = scmp.ne.s32.totalorder %s93, %s95
      %p102 = scmp.eq.s32.totalorder %s22, 1
      %p103 = por %p101, %p102
      %p104 = scmp.ne.s32.totalorder %s95, %s96
      %p105 = scmp.eq.s32.totalorder %s22, 0
      %p106 = por %p104, %p105
      %p107 = scmp.ne.s32.totalorder %s95, %s96
      %p108 = scmp.eq.s32.totalorder %s23, 1
      %p109 = por %p107, %p108
      %p111 = scmp.ne.s32.totalorder %s96, %s110
      %p112 = scmp.eq.s32.totalorder %s23, 0
      %p113 = por %p111, %p112
      %s114 = ssub.s32 %s17, %s24
      %p115 = scmp.eq.s32.totalorder %s114, 0
      %s117 = sadd.s32 %s116, 1
      %s118 = scalar_select %p115, %s116, %s117
      %p121 = pneg %p115
      %p122 = scmp.eq.s32.totalorder %s17, 1
      %p123 = por %p121, %p122
      %p124 = scmp.ne.s32.totalorder %s116, %s119
      %p125 = scmp.eq.s32.totalorder %s17, 0
      %p126 = por %p124, %p125
      %p127 = scmp.ne.s32.totalorder %s116, %s119
      %p128 = scmp.eq.s32.totalorder %s22, 1
      %p129 = por %p127, %p128
      %p130 = scmp.ne.s32.totalorder %s119, %s120
      %p131 = scmp.eq.s32.totalorder %s22, 0
      %p132 = por %p130, %p131
      %p133 = scmp.ne.s32.totalorder %s119, %s120
      %p134 = scmp.eq.s32.totalorder %s23, 1
      %p135 = por %p133, %p134
      %p137 = scmp.ne.s32.totalorder %s120, %s136
      %p138 = scmp.eq.s32.totalorder %s23, 0
      %p139 = por %p137, %p138
      %p140 = scmp.le.s32.totalorder 1, %s17
      %p141 = scmp.lt.s32.totalorder %s17, 3
      %p142 = pnand %p140, %p141
      %p143 = pneg %p142
      // Predicated region
      $region9: #{tpu_custom_call.1} parent=5 // pred_check
        _
      $region10: #{tpu_custom_call.1} parent=5 // pred_check_branch
        %145 = sbr.rel (%p142) target = $region12
      $region11: #{tpu_custom_call.1} parent=5 // pred_region
        %s146 = ssub.s32 %s17, 1
        // Predicated region
        $region13: #{tpu_custom_call.1} parent=11 // pred_check
          %p147 = pneg %p64
        $region14: #{tpu_custom_call.1} parent=11 // pred_check_branch
          %149 = sbr.rel (%p147) target = $region16
        $region15: #{tpu_custom_call.1} parent=11 // pred_region
          %s151 = ssub.s32 2048, 2048
          %152 = vsyncadd [#allocation9], %s151
          %s153 = sshll.u32 [#allocation8], 4
          %s154 = int_to_ptr.vmem [resolvable:$true] %s153
          %159 = dma.hbm_to_vmem [thread:$0]  %s1, 2048, %s154, [#allocation9], 128, 128, 8
        $region16: #{tpu_custom_call.1} parent=11 // pred_fallthru
          _
        // Predicated region
        $region17: #{tpu_custom_call.1} parent=11 // pred_check
          %p160 = pneg %p85
        $region18: #{tpu_custom_call.1} parent=11 // pred_check_branch
          %162 = sbr.rel (%p160) target = $region20
        $region19: #{tpu_custom_call.1} parent=11 // pred_region
          %s164 = ssub.s32 12288, 12288
          %165 = vsyncadd [#allocation9], %s164
          %s166 = sshll.u32 [#allocation10], 4
          %s167 = int_to_ptr.vmem [resolvable:$true] %s166
          %172 = dma.hbm_to_vmem [thread:$0]  %s2, 12288, %s167, [#allocation9], 128, 128, 8
        $region20: #{tpu_custom_call.1} parent=11 // pred_fallthru
          _
        // Predicated region
        $region21: #{tpu_custom_call.1} parent=11 // pred_check
          %p173 = pneg %p106
        $region22: #{tpu_custom_call.1} parent=11 // pred_check_branch
          %175 = sbr.rel (%p173) target = $region24
        $region23: #{tpu_custom_call.1} parent=11 // pred_region
          _
        $region24: #{tpu_custom_call.1} parent=11 // pred_fallthru
          _
      $region12: #{tpu_custom_call.1} parent=5 // pred_fallthru
        _
      %p176 = scmp.lt.s32.totalorder %s17, 2
      // Predicated region
      $region25: #{tpu_custom_call.1} parent=5 // pred_check
        %p177 = pneg %p176
      $region26: #{tpu_custom_call.1} parent=5 // pred_check_branch
        %179 = sbr.rel (%p177) target = $region28
      $region27: #{tpu_custom_call.1} parent=5 // pred_region
        // Predicated region
        $region29: #{tpu_custom_call.1} parent=27 // pred_check
          %p180 = pneg %p37
        $region30: #{tpu_custom_call.1} parent=27 // pred_check_branch
          %182 = sbr.rel (%p180) target = $region32
        $region31: #{tpu_custom_call.1} parent=27 // pred_region
          %s183 = sand.u32 %s27, 1
          %s184 = scalar_lea.sflag [#allocation6], %s183
          %s185 = sand.u32 %s27, 1
          %s186 = smul.addr %s185, 16
          %s187 = scalar_lea.vmem [#allocation5], %s186
          %s189 = ssub.s32 256, 256
          %190 = vsyncadd %s184, %s189
          %s191 = smul.addr %s17, 2
          %s192 = smul.addr %s191, 128
          %s193 = scalar_lea.hbm %s0, %s192
          %s194 = sshll.u32 %s187, 4
          %s195 = int_to_ptr.vmem [resolvable:$true] %s194
          %200 = dma.hbm_to_vmem [thread:$0]  %s193, 256, %s195, %s184, 128, 128, 8
        $region32: #{tpu_custom_call.1} parent=27 // pred_fallthru
          _
      $region28: #{tpu_custom_call.1} parent=5 // pred_fallthru
        _
      %p201 = scmp.le.s32.totalorder 1, %s17
      %p202 = scmp.lt.s32.totalorder %s17, 3
      %p203 = pnand %p201, %p202
      %p204 = pneg %p203
      // Predicated region
      $region33: #{tpu_custom_call.1} parent=5 // pred_check
        _
      $region34: #{tpu_custom_call.1} parent=5 // pred_check_branch
        %206 = sbr.rel (%p203) target = $region36
      $region35: #{tpu_custom_call.1} parent=5 // pred_region
        %s207 = ssub.s32 %s17, 1
        %s208 = sand.u32 %s30, 1
        %s209 = scalar_lea.sflag [#allocation6], %s208
        %s210 = sand.u32 %s30, 1
        %s211 = smul.addr %s210, 16
        %s212 = scalar_lea.vmem [#allocation5], %s211
        // Predicated region
        $region37: #{tpu_custom_call.1} parent=35 // pred_check
          %p213 = pneg %p43
        $region38: #{tpu_custom_call.1} parent=35 // pred_check_branch
          %215 = sbr.rel (%p213) target = $region40
        $region39: #{tpu_custom_call.1} parent=35 // pred_region
          %216 = dma.done %s209, 256
        $region40: #{tpu_custom_call.1} parent=35 // pred_fallthru
          _
        // Predicated region
        $region41: #{tpu_custom_call.1} parent=35 // pred_check
          %p217 = pneg %p64
        $region42: #{tpu_custom_call.1} parent=35 // pred_check_branch
          %219 = sbr.rel (%p217) target = $region44
        $region43: #{tpu_custom_call.1} parent=35 // pred_region
          %220 = dma.done [#allocation9], 2048
        $region44: #{tpu_custom_call.1} parent=35 // pred_fallthru
          _
        // Predicated region
        $region45: #{tpu_custom_call.1} parent=35 // pred_check
          %p221 = pneg %p85
        $region46: #{tpu_custom_call.1} parent=35 // pred_check_branch
          %223 = sbr.rel (%p221) target = $region48
        $region47: #{tpu_custom_call.1} parent=35 // pred_region
          %224 = dma.done [#allocation9], 12288
        $region48: #{tpu_custom_call.1} parent=35 // pred_fallthru
          _
        %s225 = sand.u32 %s30, 1
        %s226 = scalar_lea.sflag [#allocation6], %s225
        %s227 = sand.u32 %s30, 1
        %s228 = smul.addr %s227, 16
        %s229 = scalar_lea.vmem [#allocation5], %s228
        %p230 = pneg %p43
        %p231 = pneg %p40
        %p232 = pneg %p64
        %p233 = pneg %p61
        %p234 = pneg %p85
        %p235 = pneg %p82
        %p236 = pneg %p106
        %p237 = pneg %p103
        %p238 = pneg %p132
        %p239 = pneg %p129
        %s240 = sand.u32 %s119, 1
        %s241 = scalar_lea.sflag [#allocation7], %s240
        %s242 = sand.u32 %s119, 1
        %s243 = smul.addr %s242, 2
        %s244 = scalar_lea.vmem [#allocation11], %s243
        %v245 = vld [vmem:[%s212] sm:$0xff]
        %v246 = vld [vmem:[%s212 + $0x8] sm:$0xff]
        %v247 = vld [vmem:[#allocation8] sm:$0xff]
        %v248 = vld [vmem:[#allocation8 + $0x8] sm:$0xff]
        %v249 = vld [vmem:[#allocation8 + $0x10] sm:$0xff]
        %v250 = vld [vmem:[#allocation8 + $0x18] sm:$0xff]
        %v251 = vld [vmem:[#allocation8 + $0x20] sm:$0xff]
        %v252 = vld [vmem:[#allocation8 + $0x28] sm:$0xff]
        %v253 = vld [vmem:[#allocation8 + $0x30] sm:$0xff]
        %v254 = vld [vmem:[#allocation8 + $0x38] sm:$0xff]
        %v255 = vld [vmem:[#allocation8 + $0x40] sm:$0xff]
        %v256 = vld [vmem:[#allocation8 + $0x48] sm:$0xff]
        %v257 = vld [vmem:[#allocation8 + $0x50] sm:$0xff]
        %v258 = vld [vmem:[#allocation8 + $0x58] sm:$0xff]
        %v259 = vld [vmem:[#allocation8 + $0x60] sm:$0xff]
        %v260 = vld [vmem:[#allocation8 + $0x68] sm:$0xff]
        %v261 = vld [vmem:[#allocation8 + $0x70] sm:$0xff]
        %v262 = vld [vmem:[#allocation8 + $0x78] sm:$0xff]
        %v263 = vld [vmem:[%s3] sm:$0x1]
        %v265 = vlaneseq
        %v266 = vshrl.u32 %v265, 7
        %v267 = vsub.s32 0, %v266
        %v268 = vrot.slane %v263, %v267
        %270 = vmatprep.subr.mxu0 0.0
        %271 = vmatpush1.msra.mxu0 %v247
        %272 = vmatprep.subr.mxu0 0.0
        %273 = vmatpush1.msra.mxu0 %v248
        %274 = vmatprep.subr.mxu0 0.0
        %275 = vmatpush1.msra.mxu0 %v249
        %276 = vmatprep.subr.mxu0 0.0
        %277 = vmatpush1.msra.mxu0 %v250
        %278 = vmatprep.subr.mxu0 0.0
        %279 = vmatpush1.msra.mxu0 %v251
        %280 = vmatprep.subr.mxu0 0.0
        %281 = vmatpush1.msra.mxu0 %v252
        %282 = vmatprep.subr.mxu0 0.0
        %283 = vmatpush1.msra.mxu0 %v253
        %284 = vmatprep.subr.mxu0 0.0
        %285 = vmatpush1.msra.mxu0 %v254
        %286 = vmatprep.subr.mxu0 0.0
        %287 = vmatpush1.msra.mxu0 %v255
        %288 = vmatprep.subr.mxu0 0.0
        %289 = vmatpush1.msra.mxu0 %v256
        %290 = vmatprep.subr.mxu0 0.0
        %291 = vmatpush1.msra.mxu0 %v257
        %292 = vmatprep.subr.mxu0 0.0
        %293 = vmatpush1.msra.mxu0 %v258
        %294 = vmatprep.subr.mxu0 0.0
        %295 = vmatpush1.msra.mxu0 %v259
        %296 = vmatprep.subr.mxu0 0.0
        %297 = vmatpush1.msra.mxu0 %v260
        %298 = vmatprep.subr.mxu0 0.0
        %299 = vmatpush1.msra.mxu0 %v261
        %300 = vmatprep.subr.mxu0 0.0
        %301 = vmatpush1.msra.mxu0 %v262
        %302 = vmatprep.subr.mxu0 0.0
        %303 = vmatpush1.msra.mxu0 0.0
        %304 = vmatprep.subr.mxu0 0.0
        %305 = vmatpush1.msra.mxu0 0.0
        %306 = vmatprep.subr.mxu0 0.0
        %307 = vmatpush1.msra.mxu0 0.0
        %308 = vmatprep.subr.mxu0 0.0
        %309 = vmatpush1.msra.mxu0 0.0
        %310 = vmatprep.subr.mxu0 0.0
        %311 = vmatpush1.msra.mxu0 0.0
        %312 = vmatprep.subr.mxu0 0.0
        %313 = vmatpush1.msra.mxu0 0.0
        %314 = vmatprep.subr.mxu0 0.0
        %315 = vmatpush1.msra.mxu0 0.0
        %316 = vmatprep.subr.mxu0 0.0
        %317 = vmatpush1.msra.mxu0 0.0
        %318 = vmatprep.subr.mxu0 0.0
        %319 = vmatpush1.msra.mxu0 0.0
        %320 = vmatprep.subr.mxu0 0.0
        %321 = vmatpush1.msra.mxu0 0.0
        %322 = vmatprep.subr.mxu0 0.0
        %323 = vmatpush1.msra.mxu0 0.0
        %324 = vmatprep.subr.mxu0 0.0
        %325 = vmatpush1.msra.mxu0 0.0
        %326 = vmatprep.subr.mxu0 0.0
        %327 = vmatpush1.msra.mxu0 0.0
        %328 = vmatprep.subr.mxu0 0.0
        %329 = vmatpush1.msra.mxu0 0.0
        %330 = vmatprep.subr.mxu0 0.0
        %331 = vmatpush1.msra.mxu0 0.0
        %332 = vmatprep.subr.mxu0 0.0
        %333 = vmatpush1.msra.mxu0 0.0
        %334 = vmatprep.mubr.f32.mxu0 0.0
        %335 = vmatmul.mubr.f32.gmra.mrb[0].mxu0 %v245
        %v336 = vpop.f32.mrb[0].mxu0
        %v337 = vadd.f32 %v268, %v336
        %v338 = vpop.f32.mrb[0].mxu0
        %339 = vmatprep.mubr.f32.mxu0 0.0
        %340 = vmatmul.mubr.f32.gmra.mrb[0].mxu0 %v246
        %v341 = vpop.f32.mrb[0].mxu0
        %v342 = vadd.f32 %v268, %v341
        %v343 = vpop.f32.mrb[0].mxu0
        %344 = vdwg.mxu0
        %vm345 = vcmp.ge.f32.partialorder %v337, 0.0
        %vm346 = vcmp.ge.f32.partialorder %v342, 0.0
        %v347 = vmul.f32 %v337, 0.1
        %v348 = vmul.f32 %v342, 0.1
        %v349 = vsel %vm345, %v337, %v347
        %v350 = vsel %vm346, %v342, %v348
        %351 = vst [vmem:[#allocation2] sm:$0x1] 0.0
        %352 = vst [vmem:[#allocation2 + $0x1] sm:$0xff] %v349
        %353 = vst [vmem:[#allocation2 + $0x9] sm:$0xff] %v350
        %v354 = vld [vmem:[#allocation2] ss:$2 sm:$0xff]
        %s355 = scalar_lea.vmem [#allocation2], 1
        %v356 = vld [vmem:[%s355] ss:$2 sm:$0xff]
        %v357 = vld [vmem:[#allocation10] sm:$0xff]
        %v358 = vld [vmem:[#allocation10 + $0x8] sm:$0xff]
        %v359 = vld [vmem:[#allocation10 + $0x10] sm:$0xff]
        %v360 = vld [vmem:[#allocation10 + $0x18] sm:$0xff]
        %v361 = vld [vmem:[#allocation10 + $0x20] sm:$0xff]
        %v362 = vld [vmem:[#allocation10 + $0x28] sm:$0xff]
        %v363 = vld [vmem:[#allocation10 + $0x30] sm:$0xff]
        %v364 = vld [vmem:[#allocation10 + $0x38] sm:$0xff]
        %v365 = vld [vmem:[#allocation10 + $0x40] sm:$0xff]
        %v366 = vld [vmem:[#allocation10 + $0x48] sm:$0xff]
        %v367 = vld [vmem:[#allocation10 + $0x50] sm:$0xff]
        %v368 = vld [vmem:[#allocation10 + $0x58] sm:$0xff]
        %v369 = vld [vmem:[#allocation10 + $0x60] sm:$0xff]
        %v370 = vld [vmem:[#allocation10 + $0x68] sm:$0xff]
        %v371 = vld [vmem:[#allocation10 + $0x70] sm:$0xff]
        %v372 = vld [vmem:[#allocation10 + $0x78] sm:$0xff]
        %s373 = scalar_lea.vmem [#allocation10], 128
        %v374 = vld [vmem:[%s373] sm:$0xff]
        %v375 = vld [vmem:[%s373 + $0x8] sm:$0xff]
        %v376 = vld [vmem:[%s373 + $0x10] sm:$0xff]
        %v377 = vld [vmem:[%s373 + $0x18] sm:$0xff]
        %v378 = vld [vmem:[%s373 + $0x20] sm:$0xff]
        %v379 = vld [vmem:[%s373 + $0x28] sm:$0xff]
        %v380 = vld [vmem:[%s373 + $0x30] sm:$0xff]
        %v381 = vld [vmem:[%s373 + $0x38] sm:$0xff]
        %v382 = vld [vmem:[%s373 + $0x40] sm:$0xff]
        %v383 = vld [vmem:[%s373 + $0x48] sm:$0xff]
        %v384 = vld [vmem:[%s373 + $0x50] sm:$0xff]
        %v385 = vld [vmem:[%s373 + $0x58] sm:$0xff]
        %v386 = vld [vmem:[%s373 + $0x60] sm:$0xff]
        %v387 = vld [vmem:[%s373 + $0x68] sm:$0xff]
        %v388 = vld [vmem:[%s373 + $0x70] sm:$0xff]
        %v389 = vld [vmem:[%s373 + $0x78] sm:$0xff]
        %390 = vmatprep.subr.mxu0 0.0
        %391 = vmatpush1.msra.mxu0 %v374
        %392 = vmatprep.subr.mxu0 0.0
        %393 = vmatpush1.msra.mxu0 %v375
        %394 = vmatprep.subr.mxu0 0.0
        %395 = vmatpush1.msra.mxu0 %v376
        %396 = vmatprep.subr.mxu0 0.0
        %397 = vmatpush1.msra.mxu0 %v377
        %398 = vmatprep.subr.mxu0 0.0
        %399 = vmatpush1.msra.mxu0 %v378
        %400 = vmatprep.subr.mxu0 0.0
        %401 = vmatpush1.msra.mxu0 %v379
        %402 = vmatprep.subr.mxu0 0.0
        %403 = vmatpush1.msra.mxu0 %v380
        %404 = vmatprep.subr.mxu0 0.0
        %405 = vmatpush1.msra.mxu0 %v381
        %406 = vmatprep.subr.mxu0 0.0
        %407 = vmatpush1.msra.mxu0 %v382
        %408 = vmatprep.subr.mxu0 0.0
        %409 = vmatpush1.msra.mxu0 %v383
        %410 = vmatprep.subr.mxu0 0.0
        %411 = vmatpush1.msra.mxu0 %v384
        %412 = vmatprep.subr.mxu0 0.0
        %413 = vmatpush1.msra.mxu0 %v385
        %414 = vmatprep.subr.mxu0 0.0
        %415 = vmatpush1.msra.mxu0 %v386
        %416 = vmatprep.subr.mxu0 0.0
        %417 = vmatpush1.msra.mxu0 %v387
        %418 = vmatprep.subr.mxu0 0.0
        %419 = vmatpush1.msra.mxu0 %v388
        %420 = vmatprep.subr.mxu0 0.0
        %421 = vmatpush1.msra.mxu0 %v389
        %422 = vmatprep.subr.mxu0 0.0
        %423 = vmatpush1.msra.mxu0 0.0
        %424 = vmatprep.subr.mxu0 0.0
        %425 = vmatpush1.msra.mxu0 0.0
        %426 = vmatprep.subr.mxu0 0.0
        %427 = vmatpush1.msra.mxu0 0.0
        %428 = vmatprep.subr.mxu0 0.0
        %429 = vmatpush1.msra.mxu0 0.0
        %430 = vmatprep.subr.mxu0 0.0
        %431 = vmatpush1.msra.mxu0 0.0
        %432 = vmatprep.subr.mxu0 0.0
        %433 = vmatpush1.msra.mxu0 0.0
        %434 = vmatprep.subr.mxu0 0.0
        %435 = vmatpush1.msra.mxu0 0.0
        %436 = vmatprep.subr.mxu0 0.0
        %437 = vmatpush1.msra.mxu0 0.0
        %438 = vmatprep.subr.mxu0 0.0
        %439 = vmatpush1.msra.mxu0 0.0
        %440 = vmatprep.subr.mxu0 0.0
        %441 = vmatpush1.msra.mxu0 0.0
        %442 = vmatprep.subr.mxu0 0.0
        %443 = vmatpush1.msra.mxu0 0.0
        %444 = vmatprep.subr.mxu0 0.0
        %445 = vmatpush1.msra.mxu0 0.0
        %446 = vmatprep.subr.mxu0 0.0
        %447 = vmatpush1.msra.mxu0 0.0
        %448 = vmatprep.subr.mxu0 0.0
        %449 = vmatpush1.msra.mxu0 0.0
        %450 = vmatprep.subr.mxu0 0.0
        %451 = vmatpush1.msra.mxu0 0.0
        %452 = vmatprep.subr.mxu0 0.0
        %453 = vmatpush1.msra.mxu0 0.0
        %454 = vmatprep.mubr.f32.mxu0 0.0
        %455 = vmatmul.mubr.f32.gmra.mrb[0].mxu0 %v356
        %v456 = vpop.f32.mrb[0].mxu0
        %v457 = vadd.f32 0.0, %v456
        %v458 = vpop.f32.mrb[0].mxu0
        %459 = vdwg.mxu0
        %460 = vmatprep.subr.mxu0 0.0
        %461 = vmatpush1.msra.mxu0 %v357
        %462 = vmatprep.subr.mxu0 0.0
        %463 = vmatpush1.msra.mxu0 %v358
        %464 = vmatprep.subr.mxu0 0.0
        %465 = vmatpush1.msra.mxu0 %v359
        %466 = vmatprep.subr.mxu0 0.0
        %467 = vmatpush1.msra.mxu0 %v360
        %468 = vmatprep.subr.mxu0 0.0
        %469 = vmatpush1.msra.mxu0 %v361
        %470 = vmatprep.subr.mxu0 0.0
        %471 = vmatpush1.msra.mxu0 %v362
        %472 = vmatprep.subr.mxu0 0.0
        %473 = vmatpush1.msra.mxu0 %v363
        %474 = vmatprep.subr.mxu0 0.0
        %475 = vmatpush1.msra.mxu0 %v364
        %476 = vmatprep.subr.mxu0 0.0
        %477 = vmatpush1.msra.mxu0 %v365
        %478 = vmatprep.subr.mxu0 0.0
        %479 = vmatpush1.msra.mxu0 %v366
        %480 = vmatprep.subr.mxu0 0.0
        %481 = vmatpush1.msra.mxu0 %v367
        %482 = vmatprep.subr.mxu0 0.0
        %483 = vmatpush1.msra.mxu0 %v368
        %484 = vmatprep.subr.mxu0 0.0
        %485 = vmatpush1.msra.mxu0 %v369
        %486 = vmatprep.subr.mxu0 0.0
        %487 = vmatpush1.msra.mxu0 %v370
        %488 = vmatprep.subr.mxu0 0.0
        %489 = vmatpush1.msra.mxu0 %v371
        %490 = vmatprep.subr.mxu0 0.0
        %491 = vmatpush1.msra.mxu0 %v372
        %492 = vmatprep.subr.mxu0 0.0
        %493 = vmatpush1.msra.mxu0 0.0
        %494 = vmatprep.subr.mxu0 0.0
        %495 = vmatpush1.msra.mxu0 0.0
        %496 = vmatprep.subr.mxu0 0.0
        %497 = vmatpush1.msra.mxu0 0.0
        %498 = vmatprep.subr.mxu0 0.0
        %499 = vmatpush1.msra.mxu0 0.0
        %500 = vmatprep.subr.mxu0 0.0
        %501 = vmatpush1.msra.mxu0 0.0
        %502 = vmatprep.subr.mxu0 0.0
        %503 = vmatpush1.msra.mxu0 0.0
        %504 = vmatprep.subr.mxu0 0.0
        %505 = vmatpush1.msra.mxu0 0.0
        %506 = vmatprep.subr.mxu0 0.0
        %507 = vmatpush1.msra.mxu0 0.0
        %508 = vmatprep.subr.mxu0 0.0
        %509 = vmatpush1.msra.mxu0 0.0
        %510 = vmatprep.subr.mxu0 0.0
        %511 = vmatpush1.msra.mxu0 0.0
        %512 = vmatprep.subr.mxu0 0.0
        %513 = vmatpush1.msra.mxu0 0.0
        %514 = vmatprep.subr.mxu0 0.0
        %515 = vmatpush1.msra.mxu0 0.0
        %516 = vmatprep.subr.mxu0 0.0
        %517 = vmatpush1.msra.mxu0 0.0
        %518 = vmatprep.subr.mxu0 0.0
        %519 = vmatpush1.msra.mxu0 0.0
        %520 = vmatprep.subr.mxu0 0.0
        %521 = vmatpush1.msra.mxu0 0.0
        %522 = vmatprep.subr.mxu0 0.0
        %523 = vmatpush1.msra.mxu0 0.0
        %524 = vmatprep.mubr.f32.mxu0 0.0
        %525 = vmatmul.mubr.f32.gmra.mrb[0].mxu0 %v354
        %v526 = vpop.f32.mrb[0].mxu0
        %v527 = vadd.f32 %v457, %v526
        %v528 = vpop.f32.mrb[0].mxu0
        %529 = vdwg.mxu0
        %s530 = scalar_lea.vmem %s3, 1
        %v531 = vld [vmem:[%s530] sm:$0x1]
        %v533 = vlaneseq
        %v534 = vshrl.u32 %v533, 7
        %v535 = vsub.s32 0, %v534
        %v536 = vrot.slane %v531, %v535
        %v538 = vadd.f32 %v527, %v536
        %vm539 = vcmp.ge.f32.partialorder %v538, 0.0
        %v540 = vmul.f32 %v538, 0.1
        %v541 = vsel %vm539, %v538, %v540
        %542 = vst [vmem:[#allocation3] sm:$0x1] 0.0
        %543 = vst [vmem:[#allocation3 + $0x1] sm:$0xff] %v541
        %v544 = vld [vmem:[#allocation3] ss:$2 sm:$0xf]
        %s545 = scalar_lea.vmem [#allocation3], 1
        %v546 = vld [vmem:[%s545] ss:$2 sm:$0xf]
        %s547 = scalar_lea.vmem [#allocation10], 256
        %v548 = vld [vmem:[%s547] sm:$0xff]
        %v549 = vld [vmem:[%s547 + $0x8] sm:$0xff]
        %v550 = vld [vmem:[%s547 + $0x10] sm:$0xff]
        %v551 = vld [vmem:[%s547 + $0x18] sm:$0xff]
        %v552 = vld [vmem:[%s547 + $0x20] sm:$0xff]
        %v553 = vld [vmem:[%s547 + $0x28] sm:$0xff]
        %v554 = vld [vmem:[%s547 + $0x30] sm:$0xff]
        %v555 = vld [vmem:[%s547 + $0x38] sm:$0xff]
        %v556 = vld [vmem:[%s547 + $0x40] sm:$0xff]
        %v557 = vld [vmem:[%s547 + $0x48] sm:$0xff]
        %v558 = vld [vmem:[%s547 + $0x50] sm:$0xff]
        %v559 = vld [vmem:[%s547 + $0x58] sm:$0xff]
        %v560 = vld [vmem:[%s547 + $0x60] sm:$0xff]
        %v561 = vld [vmem:[%s547 + $0x68] sm:$0xff]
        %v562 = vld [vmem:[%s547 + $0x70] sm:$0xff]
        %v563 = vld [vmem:[%s547 + $0x78] sm:$0xff]
        %s564 = scalar_lea.vmem [#allocation10], 384
        %v565 = vld [vmem:[%s564] sm:$0xff]
        %v566 = vld [vmem:[%s564 + $0x8] sm:$0xff]
        %v567 = vld [vmem:[%s564 + $0x10] sm:$0xff]
        %v568 = vld [vmem:[%s564 + $0x18] sm:$0xff]
        %v569 = vld [vmem:[%s564 + $0x20] sm:$0xff]
        %v570 = vld [vmem:[%s564 + $0x28] sm:$0xff]
        %v571 = vld [vmem:[%s564 + $0x30] sm:$0xff]
        %v572 = vld [vmem:[%s564 + $0x38] sm:$0xff]
        %v573 = vld [vmem:[%s564 + $0x40] sm:$0xff]
        %v574 = vld [vmem:[%s564 + $0x48] sm:$0xff]
        %v575 = vld [vmem:[%s564 + $0x50] sm:$0xff]
        %v576 = vld [vmem:[%s564 + $0x58] sm:$0xff]
        %v577 = vld [vmem:[%s564 + $0x60] sm:$0xff]
        %v578 = vld [vmem:[%s564 + $0x68] sm:$0xff]
        %v579 = vld [vmem:[%s564 + $0x70] sm:$0xff]
        %v580 = vld [vmem:[%s564 + $0x78] sm:$0xff]
        %581 = vmatprep.subr.mxu0 0.0
        %582 = vmatpush1.msra.mxu0 %v565
        %583 = vmatprep.subr.mxu0 0.0
        %584 = vmatpush1.msra.mxu0 %v566
        %585 = vmatprep.subr.mxu0 0.0
        %586 = vmatpush1.msra.mxu0 %v567
        %587 = vmatprep.subr.mxu0 0.0
        %588 = vmatpush1.msra.mxu0 %v568
        %589 = vmatprep.subr.mxu0 0.0
        %590 = vmatpush1.msra.mxu0 %v569
        %591 = vmatprep.subr.mxu0 0.0
        %592 = vmatpush1.msra.mxu0 %v570
        %593 = vmatprep.subr.mxu0 0.0
        %594 = vmatpush1.msra.mxu0 %v571
        %595 = vmatprep.subr.mxu0 0.0
        %596 = vmatpush1.msra.mxu0 %v572
        %597 = vmatprep.subr.mxu0 0.0
        %598 = vmatpush1.msra.mxu0 %v573
        %599 = vmatprep.subr.mxu0 0.0
        %600 = vmatpush1.msra.mxu0 %v574
        %601 = vmatprep.subr.mxu0 0.0
        %602 = vmatpush1.msra.mxu0 %v575
        %603 = vmatprep.subr.mxu0 0.0
        %604 = vmatpush1.msra.mxu0 %v576
        %605 = vmatprep.subr.mxu0 0.0
        %606 = vmatpush1.msra.mxu0 %v577
        %607 = vmatprep.subr.mxu0 0.0
        %608 = vmatpush1.msra.mxu0 %v578
        %609 = vmatprep.subr.mxu0 0.0
        %610 = vmatpush1.msra.mxu0 %v579
        %611 = vmatprep.subr.mxu0 0.0
        %612 = vmatpush1.msra.mxu0 %v580
        %613 = vmatprep.subr.mxu0 0.0
        %614 = vmatpush1.msra.mxu0 0.0
        %615 = vmatprep.subr.mxu0 0.0
        %616 = vmatpush1.msra.mxu0 0.0
        %617 = vmatprep.subr.mxu0 0.0
        %618 = vmatpush1.msra.mxu0 0.0
        %619 = vmatprep.subr.mxu0 0.0
        %620 = vmatpush1.msra.mxu0 0.0
        %621 = vmatprep.subr.mxu0 0.0
        %622 = vmatpush1.msra.mxu0 0.0
        %623 = vmatprep.subr.mxu0 0.0
        %624 = vmatpush1.msra.mxu0 0.0
        %625 = vmatprep.subr.mxu0 0.0
        %626 = vmatpush1.msra.mxu0 0.0
        %627 = vmatprep.subr.mxu0 0.0
        %628 = vmatpush1.msra.mxu0 0.0
        %629 = vmatprep.subr.mxu0 0.0
        %630 = vmatpush1.msra.mxu0 0.0
        %631 = vmatprep.subr.mxu0 0.0
        %632 = vmatpush1.msra.mxu0 0.0
        %633 = vmatprep.subr.mxu0 0.0
        %634 = vmatpush1.msra.mxu0 0.0
        %635 = vmatprep.subr.mxu0 0.0
        %636 = vmatpush1.msra.mxu0 0.0
        %637 = vmatprep.subr.mxu0 0.0
        %638 = vmatpush1.msra.mxu0 0.0
        %639 = vmatprep.subr.mxu0 0.0
        %640 = vmatpush1.msra.mxu0 0.0
        %641 = vmatprep.subr.mxu0 0.0
        %642 = vmatpush1.msra.mxu0 0.0
        %643 = vmatprep.subr.mxu0 0.0
        %644 = vmatpush1.msra.mxu0 0.0
        %645 = vmatprep.mubr.f32.mxu0 0.0
        %646 = vmatmul.mubr.f32.gmra.mrb[0].mxu0 %v546
        %v647 = vpop.f32.mrb[0].mxu0
        %v648 = vadd.f32 0.0, %v647
        %v649 = vpop.f32.mrb[0].mxu0
        %650 = vdwg.mxu0
        %651 = vmatprep.subr.mxu0 0.0
        %652 = vmatpush1.msra.mxu0 %v548
        %653 = vmatprep.subr.mxu0 0.0
        %654 = vmatpush1.msra.mxu0 %v549
        %655 = vmatprep.subr.mxu0 0.0
        %656 = vmatpush1.msra.mxu0 %v550
        %657 = vmatprep.subr.mxu0 0.0
        %658 = vmatpush1.msra.mxu0 %v551
        %659 = vmatprep.subr.mxu0 0.0
        %660 = vmatpush1.msra.mxu0 %v552
        %661 = vmatprep.subr.mxu0 0.0
        %662 = vmatpush1.msra.mxu0 %v553
        %663 = vmatprep.subr.mxu0 0.0
        %664 = vmatpush1.msra.mxu0 %v554
        %665 = vmatprep.subr.mxu0 0.0
        %666 = vmatpush1.msra.mxu0 %v555
        %667 = vmatprep.subr.mxu0 0.0
        %668 = vmatpush1.msra.mxu0 %v556
        %669 = vmatprep.subr.mxu0 0.0
        %670 = vmatpush1.msra.mxu0 %v557
        %671 = vmatprep.subr.mxu0 0.0
        %672 = vmatpush1.msra.mxu0 %v558
        %673 = vmatprep.subr.mxu0 0.0
        %674 = vmatpush1.msra.mxu0 %v559
        %675 = vmatprep.subr.mxu0 0.0
        %676 = vmatpush1.msra.mxu0 %v560
        %677 = vmatprep.subr.mxu0 0.0
        %678 = vmatpush1.msra.mxu0 %v561
        %679 = vmatprep.subr.mxu0 0.0
        %680 = vmatpush1.msra.mxu0 %v562
        %681 = vmatprep.subr.mxu0 0.0
        %682 = vmatpush1.msra.mxu0 %v563
        %683 = vmatprep.subr.mxu0 0.0
        %684 = vmatpush1.msra.mxu0 0.0
        %685 = vmatprep.subr.mxu0 0.0
        %686 = vmatpush1.msra.mxu0 0.0
        %687 = vmatprep.subr.mxu0 0.0
        %688 = vmatpush1.msra.mxu0 0.0
        %689 = vmatprep.subr.mxu0 0.0
        %690 = vmatpush1.msra.mxu0 0.0
        %691 = vmatprep.subr.mxu0 0.0
        %692 = vmatpush1.msra.mxu0 0.0
        %693 = vmatprep.subr.mxu0 0.0
        %694 = vmatpush1.msra.mxu0 0.0
        %695 = vmatprep.subr.mxu0 0.0
        %696 = vmatpush1.msra.mxu0 0.0
        %697 = vmatprep.subr.mxu0 0.0
        %698 = vmatpush1.msra.mxu0 0.0
        %699 = vmatprep.subr.mxu0 0.0
        %700 = vmatpush1.msra.mxu0 0.0
        %701 = vmatprep.subr.mxu0 0.0
        %702 = vmatpush1.msra.mxu0 0.0
        %703 = vmatprep.subr.mxu0 0.0
        %704 = vmatpush1.msra.mxu0 0.0
        %705 = vmatprep.subr.mxu0 0.0
        %706 = vmatpush1.msra.mxu0 0.0
        %707 = vmatprep.subr.mxu0 0.0
        %708 = vmatpush1.msra.mxu0 0.0
        %709 = vmatprep.subr.mxu0 0.0
        %710 = vmatpush1.msra.mxu0 0.0
        %711 = vmatprep.subr.mxu0 0.0
        %712 = vmatpush1.msra.mxu0 0.0
        %713 = vmatprep.subr.mxu0 0.0
        %714 = vmatpush1.msra.mxu0 0.0
        %715 = vmatprep.mubr.f32.mxu0 0.0
        %716 = vmatmul.mubr.f32.gmra.mrb[0].mxu0 %v544
        %v717 = vpop.f32.mrb[0].mxu0
        %v718 = vadd.f32 %v648, %v717
        %v719 = vpop.f32.mrb[0].mxu0
        %720 = vdwg.mxu0
        %s721 = scalar_lea.vmem %s3, 2
        %v722 = vld [vmem:[%s721] sm:$0x1]
        %v724 = vlaneseq
        %v725 = vshrl.u32 %v724, 7
        %v726 = vsub.s32 0, %v725
        %v727 = vrot.slane %v722, %v726
        %v729 = vadd.f32 %v718, %v727
        %vm730 = vcmp.ge.f32.partialorder %v729, 0.0
        %v731 = vmul.f32 %v729, 0.1
        %v732 = vsel %vm730, %v729, %v731
        %733 = vst [vmem:[#allocation4] sm:$0x1] 0.0
        %734 = vst [vmem:[#allocation4 + $0x1] sm:$0xf] %v732
        %v735 = vld [vmem:[#allocation4] ss:$2 sm:$0x3]
        %s736 = scalar_lea.vmem [#allocation4], 1
        %v737 = vld [vmem:[%s736] ss:$2 sm:$0x3]
        %s738 = scalar_lea.vmem [#allocation10], 512
        %v739 = vld [vmem:[%s738] sm:$0xff]
        %v740 = vld [vmem:[%s738 + $0x8] sm:$0xff]
        %v741 = vld [vmem:[%s738 + $0x10] sm:$0xff]
        %v742 = vld [vmem:[%s738 + $0x18] sm:$0xff]
        %v743 = vld [vmem:[%s738 + $0x20] sm:$0xff]
        %v744 = vld [vmem:[%s738 + $0x28] sm:$0xff]
        %v745 = vld [vmem:[%s738 + $0x30] sm:$0xff]
        %v746 = vld [vmem:[%s738 + $0x38] sm:$0xff]
        %v747 = vld [vmem:[%s738 + $0x40] sm:$0xff]
        %v748 = vld [vmem:[%s738 + $0x48] sm:$0xff]
        %v749 = vld [vmem:[%s738 + $0x50] sm:$0xff]
        %v750 = vld [vmem:[%s738 + $0x58] sm:$0xff]
        %v751 = vld [vmem:[%s738 + $0x60] sm:$0xff]
        %v752 = vld [vmem:[%s738 + $0x68] sm:$0xff]
        %v753 = vld [vmem:[%s738 + $0x70] sm:$0xff]
        %v754 = vld [vmem:[%s738 + $0x78] sm:$0xff]
        %s755 = scalar_lea.vmem [#allocation10], 640
        %v756 = vld [vmem:[%s755] sm:$0xff]
        %v757 = vld [vmem:[%s755 + $0x8] sm:$0xff]
        %v758 = vld [vmem:[%s755 + $0x10] sm:$0xff]
        %v759 = vld [vmem:[%s755 + $0x18] sm:$0xff]
        %v760 = vld [vmem:[%s755 + $0x20] sm:$0xff]
        %v761 = vld [vmem:[%s755 + $0x28] sm:$0xff]
        %v762 = vld [vmem:[%s755 + $0x30] sm:$0xff]
        %v763 = vld [vmem:[%s755 + $0x38] sm:$0xff]
        %v764 = vld [vmem:[%s755 + $0x40] sm:$0xff]
        %v765 = vld [vmem:[%s755 + $0x48] sm:$0xff]
        %v766 = vld [vmem:[%s755 + $0x50] sm:$0xff]
        %v767 = vld [vmem:[%s755 + $0x58] sm:$0xff]
        %v768 = vld [vmem:[%s755 + $0x60] sm:$0xff]
        %v769 = vld [vmem:[%s755 + $0x68] sm:$0xff]
        %v770 = vld [vmem:[%s755 + $0x70] sm:$0xff]
        %v771 = vld [vmem:[%s755 + $0x78] sm:$0xff]
        %772 = vmatprep.subr.mxu0 0.0
        %773 = vmatpush1.msra.mxu0 %v756
        %774 = vmatprep.subr.mxu0 0.0
        %775 = vmatpush1.msra.mxu0 %v757
        %776 = vmatprep.subr.mxu0 0.0
        %777 = vmatpush1.msra.mxu0 %v758
        %778 = vmatprep.subr.mxu0 0.0
        %779 = vmatpush1.msra.mxu0 %v759
        %780 = vmatprep.subr.mxu0 0.0
        %781 = vmatpush1.msra.mxu0 %v760
        %782 = vmatprep.subr.mxu0 0.0
        %783 = vmatpush1.msra.mxu0 %v761
        %784 = vmatprep.subr.mxu0 0.0
        %785 = vmatpush1.msra.mxu0 %v762
        %786 = vmatprep.subr.mxu0 0.0
        %787 = vmatpush1.msra.mxu0 %v763
        %788 = vmatprep.subr.mxu0 0.0
        %789 = vmatpush1.msra.mxu0 %v764
        %790 = vmatprep.subr.mxu0 0.0
        %791 = vmatpush1.msra.mxu0 %v765
        %792 = vmatprep.subr.mxu0 0.0
        %793 = vmatpush1.msra.mxu0 %v766
        %794 = vmatprep.subr.mxu0 0.0
        %795 = vmatpush1.msra.mxu0 %v767
        %796 = vmatprep.subr.mxu0 0.0
        %797 = vmatpush1.msra.mxu0 %v768
        %798 = vmatprep.subr.mxu0 0.0
        %799 = vmatpush1.msra.mxu0 %v769
        %800 = vmatprep.subr.mxu0 0.0
        %801 = vmatpush1.msra.mxu0 %v770
        %802 = vmatprep.subr.mxu0 0.0
        %803 = vmatpush1.msra.mxu0 %v771
        %804 = vmatprep.subr.mxu0 0.0
        %805 = vmatpush1.msra.mxu0 0.0
        %806 = vmatprep.subr.mxu0 0.0
        %807 = vmatpush1.msra.mxu0 0.0
        %808 = vmatprep.subr.mxu0 0.0
        %809 = vmatpush1.msra.mxu0 0.0
        %810 = vmatprep.subr.mxu0 0.0
        %811 = vmatpush1.msra.mxu0 0.0
        %812 = vmatprep.subr.mxu0 0.0
        %813 = vmatpush1.msra.mxu0 0.0
        %814 = vmatprep.subr.mxu0 0.0
        %815 = vmatpush1.msra.mxu0 0.0
        %816 = vmatprep.subr.mxu0 0.0
        %817 = vmatpush1.msra.mxu0 0.0
        %818 = vmatprep.subr.mxu0 0.0
        %819 = vmatpush1.msra.mxu0 0.0
        %820 = vmatprep.subr.mxu0 0.0
        %821 = vmatpush1.msra.mxu0 0.0
        %822 = vmatprep.subr.mxu0 0.0
        %823 = vmatpush1.msra.mxu0 0.0
        %824 = vmatprep.subr.mxu0 0.0
        %825 = vmatpush1.msra.mxu0 0.0
        %826 = vmatprep.subr.mxu0 0.0
        %827 = vmatpush1.msra.mxu0 0.0
        %828 = vmatprep.subr.mxu0 0.0
        %829 = vmatpush1.msra.mxu0 0.0
        %830 = vmatprep.subr.mxu0 0.0
        %831 = vmatpush1.msra.mxu0 0.0
        %832 = vmatprep.subr.mxu0 0.0
        %833 = vmatpush1.msra.mxu0 0.0
        %834 = vmatprep.subr.mxu0 0.0
        %835 = vmatpush1.msra.mxu0 0.0
        %836 = vmatprep.mubr.f32.mxu0 0.0
        %837 = vmatmul.mubr.f32.gmra.mrb[0].mxu0 %v737
        %v838 = vpop.f32.mrb[0].mxu0
        %v839 = vadd.f32 0.0, %v838
        %v840 = vpop.f32.mrb[0].mxu0
        %841 = vdwg.mxu0
        %842 = vmatprep.subr.mxu0 0.0
        %843 = vmatpush1.msra.mxu0 %v739
        %844 = vmatprep.subr.mxu0 0.0
        %845 = vmatpush1.msra.mxu0 %v740
        %846 = vmatprep.subr.mxu0 0.0
        %847 = vmatpush1.msra.mxu0 %v741
        %848 = vmatprep.subr.mxu0 0.0
        %849 = vmatpush1.msra.mxu0 %v742
        %850 = vmatprep.subr.mxu0 0.0
        %851 = vmatpush1.msra.mxu0 %v743
        %852 = vmatprep.subr.mxu0 0.0
        %853 = vmatpush1.msra.mxu0 %v744
        %854 = vmatprep.subr.mxu0 0.0
        %855 = vmatpush1.msra.mxu0 %v745
        %856 = vmatprep.subr.mxu0 0.0
        %857 = vmatpush1.msra.mxu0 %v746
        %858 = vmatprep.subr.mxu0 0.0
        %859 = vmatpush1.msra.mxu0 %v747
        %860 = vmatprep.subr.mxu0 0.0
        %861 = vmatpush1.msra.mxu0 %v748
        %862 = vmatprep.subr.mxu0 0.0
        %863 = vmatpush1.msra.mxu0 %v749
        %864 = vmatprep.subr.mxu0 0.0
        %865 = vmatpush1.msra.mxu0 %v750
        %866 = vmatprep.subr.mxu0 0.0
        %867 = vmatpush1.msra.mxu0 %v751
        %868 = vmatprep.subr.mxu0 0.0
        %869 = vmatpush1.msra.mxu0 %v752
        %870 = vmatprep.subr.mxu0 0.0
        %871 = vmatpush1.msra.mxu0 %v753
        %872 = vmatprep.subr.mxu0 0.0
        %873 = vmatpush1.msra.mxu0 %v754
        %874 = vmatprep.subr.mxu0 0.0
        %875 = vmatpush1.msra.mxu0 0.0
        %876 = vmatprep.subr.mxu0 0.0
        %877 = vmatpush1.msra.mxu0 0.0
        %878 = vmatprep.subr.mxu0 0.0
        %879 = vmatpush1.msra.mxu0 0.0
        %880 = vmatprep.subr.mxu0 0.0
        %881 = vmatpush1.msra.mxu0 0.0
        %882 = vmatprep.subr.mxu0 0.0
        %883 = vmatpush1.msra.mxu0 0.0
        %884 = vmatprep.subr.mxu0 0.0
        %885 = vmatpush1.msra.mxu0 0.0
        %886 = vmatprep.subr.mxu0 0.0
        %887 = vmatpush1.msra.mxu0 0.0
        %888 = vmatprep.subr.mxu0 0.0
        %889 = vmatpush1.msra.mxu0 0.0
        %890 = vmatprep.subr.mxu0 0.0
        %891 = vmatpush1.msra.mxu0 0.0
        %892 = vmatprep.subr.mxu0 0.0
        %893 = vmatpush1.msra.mxu0 0.0
        %894 = vmatprep.subr.mxu0 0.0
        %895 = vmatpush1.msra.mxu0 0.0
        %896 = vmatprep.subr.mxu0 0.0
        %897 = vmatpush1.msra.mxu0 0.0
        %898 = vmatprep.subr.mxu0 0.0
        %899 = vmatpush1.msra.mxu0 0.0
        %900 = vmatprep.subr.mxu0 0.0
        %901 = vmatpush1.msra.mxu0 0.0
        %902 = vmatprep.subr.mxu0 0.0
        %903 = vmatpush1.msra.mxu0 0.0
        %904 = vmatprep.subr.mxu0 0.0
        %905 = vmatpush1.msra.mxu0 0.0
        %906 = vmatprep.mubr.f32.mxu0 0.0
        %907 = vmatmul.mubr.f32.gmra.mrb[0].mxu0 %v735
        %v908 = vpop.f32.mrb[0].mxu0
        %v909 = vadd.f32 %v839, %v908
        %v910 = vpop.f32.mrb[0].mxu0
        %911 = vdwg.mxu0
        %s912 = scalar_lea.vmem %s3, 3
        %v913 = vld [vmem:[%s912] sm:$0x1]
        %v915 = vlaneseq
        %v916 = vshrl.u32 %v915, 7
        %v917 = vsub.s32 0, %v916
        %v918 = vrot.slane %v913, %v917
        %v920 = vadd.f32 %v909, %v918
        %vm921 = vcmp.ge.f32.partialorder %v920, 0.0
        %v922 = vmul.f32 %v920, 0.1
        %v923 = vsel %vm921, %v920, %v922
        %924 = vst [vmem:[%s244] sm:$0x3] %v923
        %s925 = sand.u32 %s119, 1
        %s926 = scalar_lea.sflag [#allocation7], %s925
        %s927 = sand.u32 %s119, 1
        %s928 = smul.addr %s927, 2
        %s929 = scalar_lea.vmem [#allocation11], %s928
        // Predicated region
        $region49: #{tpu_custom_call.1} parent=35 // pred_check
          %p930 = pneg %p129
        $region50: #{tpu_custom_call.1} parent=35 // pred_check_branch
          %932 = sbr.rel (%p930) target = $region52
        $region51: #{tpu_custom_call.1} parent=35 // pred_region
          %s934 = ssub.s32 32, 32
          %935 = vsyncadd %s926, %s934
          %s936 = smul.addr %s22, 32
          %s937 = scalar_lea.hbm %s4, %s936
          %s939 = sshll.u32 %s929, 4
          %s940 = int_to_ptr.vmem [resolvable:$true] %s939
          %942 = dma.vmem_to_hbm [thread:$0]  %s940, 32, %s937, %s926
        $region52: #{tpu_custom_call.1} parent=35 // pred_fallthru
          _
      $region36: #{tpu_custom_call.1} parent=5 // pred_fallthru
        _
      %p943 = scmp.le.s32.totalorder 2, %s17
      // Predicated region
      $region53: #{tpu_custom_call.1} parent=5 // pred_check
        %p944 = pneg %p943
      $region54: #{tpu_custom_call.1} parent=5 // pred_check_branch
        %946 = sbr.rel (%p944) target = $region56
      $region55: #{tpu_custom_call.1} parent=5 // pred_region
        %s947 = ssub.s32 %s17, 2
        // Predicated region
        $region57: #{tpu_custom_call.1} parent=55 // pred_check
          %p948 = pneg %p135
        $region58: #{tpu_custom_call.1} parent=55 // pred_check_branch
          %950 = sbr.rel (%p948) target = $region60
        $region59: #{tpu_custom_call.1} parent=55 // pred_region
          %s951 = sand.u32 %s120, 1
          %s952 = scalar_lea.sflag [#allocation7], %s951
          %s953 = sand.u32 %s120, 1
          %s954 = smul.addr %s953, 2
          %s955 = scalar_lea.vmem [#allocation11], %s954
          %956 = dma.done %s952, 32
        $region60: #{tpu_custom_call.1} parent=55 // pred_fallthru
          _
      $region56: #{tpu_custom_call.1} parent=5 // pred_fallthru
        _
    $region6: #{tpu_custom_call.1} parent=1 // loop_footer
      %s21 = sadd.s32 1, %s17
    $region7: #{tpu_custom_call.1} parent=1 // loop_footer_branch
      %16 = sbr.rel target = $region3
    $region8: #{tpu_custom_call.1} parent=1 // loop_exit
      _
    %957 = vsyncpa [#allocation6], 1
    %s958 = scalar_lea.sflag [#allocation6], 1
    %959 = vsyncpa %s958, 1
    %960 = vsyncpa [#allocation9], 1
    %961 = vsyncpa [#allocation7], 1
    %s962 = scalar_lea.sflag [#allocation7], 1
    %963 = vsyncpa %s962, 1

</llo_original>
